<compile_context>
chip_gen: v7x
topology: tpu7x:2x2x1
jax: 0.10.0
libtpu: 0.0.40
codegen_flags: <defaults>
</compile_context>

<pallas_src>
import functools

import jax
import jax.numpy as jnp
from jax.experimental import pallas as pl
from jax.experimental.pallas import tpu as pltpu

RADIUS = 2
K = 2 * RADIUS + 1          # 5x5 neighbourhood
ETA = 0.05


def _make_rule_kernel(skip_center: bool):
    """Builds the per-step kernel; skip_center is a static (init-time) flag."""

    def rule_kernel(x0_ref, noise_ref, ei_ref, k_ref, z_ref, v_ref, pad_ref):
        # x0/noise/ei refs: (H, W) f32 (leading batch/channel dims squeezed by BlockSpec)
        # k_ref: (K*K, H, W) bf16; z_ref: (2, H, W) f32 out
        # v_ref (scratch): (H, W) f32 persistent CA state across the time grid
        # pad_ref (scratch): (H+2R, W+2R) f32 wrap-padded plane
        H, W = x0_ref.shape
        R = RADIUS
        t = pl.program_id(0)

        @pl.when(t == 0)
        def _init():
            v_ref[...] = x0_ref[...]          # state_0 = x[:, 0]

        ei = ei_ref[...]
        V = v_ref[...] + noise_ref[...]       # V = state + noise_t (fused glue)
        vei = V * ei                          # V * EI               (fused glue)

        # ---- circular ("wrap") padding into the VMEM scratch ------------------
        # Rows first (top/bottom strips), then columns; the column wrap copies the
        # already row-wrapped data, so corners match F.pad(mode='circular').
        pad_ref[R:R + H, R:R + W] = vei
        pad_ref[0:R, R:R + W] = vei[H - R:H, :]
        pad_ref[R + H:R + H + R, R:R + W] = vei[0:R, :]
        pad_ref[:, 0:R] = pad_ref[:, W:W + R]
        pad_ref[:, R + W:R + W + R] = pad_ref[:, R:R + R]

        # ---- spatially-varying 5x5 cross-correlation (== unfold * k, sum taps) --
        # 4 independent accumulators expose ILP across the VALU slots instead of a
        # single 24-deep serial add chain.
        accs = [None, None, None, None]
        m = 0
        for dy in range(K):
            slab = pad_ref[dy:dy + H, :]      # each row-slab loaded once (5 loads)
            for dx in range(K):
                if skip_center and dy == RADIUS and dx == RADIUS:
                    continue                  # centre tap statically known zero
                w_plane = k_ref[dy * K + dx].astype(jnp.float32)   # bf16 -> f32
                prod = slab[:, dx:dx + W] * w_plane
                lane = m % 4
                accs[lane] = prod if accs[lane] is None else accs[lane] + prod
                m += 1
        I = (accs[0] + accs[1]) + (accs[2] + accs[3])

        # sigmoid(I) = 0.5*(tanh(I/2)+1): tanh goes to the EUP, no VPU divide.
        sig = 0.5 * (jnp.tanh(0.5 * I) + 1.0)
        V_new = (1.0 - ETA) * V + ETA * (1.0 - V) * sig
        v_ref[...] = V_new                    # carry state to the next step

        @pl.when(t == pl.num_programs(0) - 1)
        def _finalize():
            z_ref[0] = V_new
            z_ref[1] = ei                     # EI already resident; no host concat

    return rule_kernel


@functools.partial(jax.jit, static_argnames=("skip_center_tap",))
def rule_forward(x, noise_seq, ei, kmap, *, skip_center_tap=True):
    """Runs T = noise_seq.shape[0] fused CA steps in ONE pallas_call.

    x:         (1, C, H, W) f32   -- only channel 0 is read (selected via index_map)
    noise_seq: (T, 1, H, W) f32   -- per-step additive noise; T=1 == Rule.forward
    ei:        (1, 1, H, W) f32
    kmap:      (1, K*K, H, W) bf16 -- CPPN kernel, reshaped/cast once at init
    returns z: (1, 2, H, W) f32   -- state after the last step: [V_new, EI]
    """
    _, _, H, W = x.shape
    T = noise_seq.shape[0]
    R = RADIUS
    assert H >= K and W >= K, "wrap padding requires RES >= kernel size"

    # Whole-array VMEM residency: raise the scoped limit only when the smallest
    # default (16 MiB on v5e; 32 MiB on v6e/v7x) would be exceeded.
    plane = H * W * 4
    kmap_bytes = K * K * H * W * kmap.dtype.itemsize
    pad_bytes = (H + 2 * R) * (W + 2 * R) * 4
    est = 2 * (3 * plane + kmap_bytes) + 2 * 2 * plane + plane + pad_bytes + (1 << 20)
    cp_kwargs = dict(dimension_semantics=("arbitrary",))   # steps are sequential
    if est > (16 << 20):
        # TODO(synk): near v7x's 64 MiB physical VMEM, tile over H instead.
        cp_kwargs["vmem_limit_bytes"] = int(est)

    kern = _make_rule_kernel(bool(skip_center_tap))

    z = pl.pallas_call(
        kern,
        out_shape=jax.ShapeDtypeStruct((2, H, W), jnp.float32),
        grid_spec=pltpu.PrefetchScalarGridSpec(
            num_scalar_prefetch=0,
            grid=(T,),
            in_specs=[
                # x: batch 0, channel 0 selected by the index_map; DMA'd once.
                pl.BlockSpec((None, None, H, W), lambda t: (0, 0, 0, 0)),
                # noise: one (H, W) plane per time step (double-buffered).
                pl.BlockSpec((None, None, H, W), lambda t: (t, 0, 0, 0)),
                # ei / kmap: constant block index -> resident across all steps.
                pl.BlockSpec((None, None, H, W), lambda t: (0, 0, 0, 0)),
                pl.BlockSpec((None, K * K, H, W), lambda t: (0, 0, 0, 0)),
            ],
            out_specs=pl.BlockSpec((2, H, W), lambda t: (0, 0, 0)),
            scratch_shapes=[
                pltpu.VMEM((H, W), jnp.float32),                       # CA state V
                pltpu.VMEM((H + 2 * R, W + 2 * R), jnp.float32),       # wrap-padded plane
            ],
        ),
        compiler_params=pltpu.CompilerParams(**cp_kwargs),
    )(x, noise_seq, ei, kmap)

    return z[None]                                       # (1, 2, H, W)


def reference_forward(x, noise_input, ei, nearest_neighbours, res):
    """Pure-JAX reference mirroring the PyTorch unfold-based forward (one step)."""
    H, W = res
    R = RADIUS
    V = x[:, :1] + noise_input                            # (1,1,H,W)
    vei = (V * ei)[0, 0]
    vei_pad = jnp.pad(vei, ((R, R), (R, R)), mode="wrap")
    patches = jnp.stack(
        [vei_pad[dy:dy + H, dx:dx + W].reshape(-1) for dy in range(K) for dx in range(K)],
        axis=0)[None]                                     # (1, K*K, H*W)
    I = (patches * nearest_neighbours).sum(axis=1).reshape(1, 1, H, W)
    V_new = (1.0 - ETA) * V + ETA * (1.0 - V) * jax.nn.sigmoid(I)
    return jnp.concatenate([V_new, ei], axis=1)


if __name__ == "__main__":
    H, W = 16, 16
    NUMEL = H * W

    key = jax.random.PRNGKey(0)
    k_x, k_noise, k_ei, k_nn, k_seq = jax.random.split(key, 5)

    # x: (1, 2, H, W) — only channel 0 (membrane potential V) is read by forward.
    x = jax.random.uniform(k_x, (1, 2, H, W), dtype=jnp.float32)
    noise_1 = 0.01 * jax.random.normal(k_noise, (1, 1, H, W), dtype=jnp.float32)

    # EI map: +1 excitatory with prob 0.8, -1 inhibitory otherwise (excite_prob).
    ei = jnp.where(jax.random.uniform(k_ei, (1, 1, H, W)) < 0.8, 1.0, -1.0).astype(jnp.float32)

    # nearest_neighbours: synthetic stand-in for the CPPN kernel, (1, K*K, NUMEL),
    # values in [0,1], centre tap zeroed (as generate_cppn_kernel does).
    nn_k = jax.random.uniform(k_nn, (1, K * K, NUMEL), dtype=jnp.float32)
    center = RADIUS * K + RADIUS
    nn_k = nn_k.at[:, center, :].set(0.0)

    # ---- one-time init (mirrors __init__): bf16 cast + (K*K, H, W) layout, and a
    # static check that the centre tap really is zero before skipping it in-kernel.
    kmap_bf16 = nn_k.astype(jnp.bfloat16).reshape(1, K * K, H, W)
    skip_center = bool(jnp.all(nn_k[:, center, :] == 0.0))

    # ---- single step: matches Rule.forward exactly -------------------------------
    z1 = rule_forward(x, noise_1, ei, kmap_bf16, skip_center_tap=skip_center)
    z1 = jax.block_until_ready(z1)
    assert z1.shape == (1, 2, H, W)

    nn_bf16_flat = kmap_bf16.reshape(1, K * K, NUMEL).astype(jnp.float32)
    z_ref = reference_forward(x, noise_1, ei, nn_bf16_flat, (H, W))
    assert jnp.allclose(z1, z_ref, atol=1e-5, rtol=1e-5), "mismatch vs reference (bf16 weights)"

    z_ref_f32 = reference_forward(x, noise_1, ei, nn_k, (H, W))
    assert jnp.allclose(z1, z_ref_f32, atol=5e-3, rtol=5e-3), "bf16 weight error too large"

    # ---- T fused steps in ONE pallas_call (launch/HBM amortisation) --------------
    T = 8
    noise_seq = 0.01 * jax.random.normal(k_seq, (T, 1, H, W), dtype=jnp.float32)
    zT = rule_forward(x, noise_seq, ei, kmap_bf16, skip_center_tap=skip_center)
    zT = jax.block_until_ready(zT)

    # reference: iterate the single-step reference, feeding V back as channel 0.
    V = x[:, :1]
    z_it = None
    for t in range(T):
        z_it = reference_forward(jnp.concatenate([V, ei], axis=1), noise_seq[t:t + 1],
                                 ei, nn_bf16_flat, (H, W))
        V = z_it[:, :1]
    assert jnp.allclose(zT, z_it, atol=1e-4, rtol=1e-4), "multi-step fusion mismatch"

    print("KERNEL_OK")
</pallas_src>

<mosaic_0001>
module attributes {stable_mosaic.version = 11 : i64} {
  func.func @rule_kernel(%arg0: i32, %arg1: memref<1x1x16x16xf32, #tpu.memory_space<vmem>>, %arg2: memref<1x1x16x16xf32, #tpu.memory_space<vmem>>, %arg3: memref<1x1x16x16xf32, #tpu.memory_space<vmem>>, %arg4: memref<1x25x16x16xbf16, #tpu.memory_space<vmem>>, %arg5: memref<2x16x16xf32, #tpu.memory_space<vmem>>, %arg6: memref<16x16xf32, #tpu.memory_space<vmem>>, %arg7: memref<20x20xf32, #tpu.memory_space<vmem>>) attributes {dimension_semantics = [#tpu.dimension_semantics<arbitrary>], iteration_bounds = array<i64: 1>, scalar_prefetch = 0 : i64, scratch_operands = 2 : i64, tpu.core_type = #tpu.core_type<tc>, window_params = [{transform_indices = @transform_0, window_bounds = array<i64: 1, 1, 16, 16>}, {transform_indices = @transform_1, window_bounds = array<i64: 1, 1, 16, 16>}, {pipeline_mode = #tpu.pipeline_mode<synchronous>, transform_indices = @transform_2, window_bounds = array<i64: 1, 1, 16, 16>}, {pipeline_mode = #tpu.pipeline_mode<synchronous>, transform_indices = @transform_3, window_bounds = array<i64: 1, 25, 16, 16>}, {pipeline_mode = #tpu.pipeline_mode<synchronous>, transform_indices = @transform_4, window_bounds = array<i64: 2, 16, 16>}]} {
    %c0_i32 = arith.constant 0 : i32
    %0 = arith.cmpi eq, %arg0, %c0_i32 : i32
    %1 = arith.extui %0 : i1 to i32
    %c0_i32_0 = arith.constant 0 : i32
    %2 = arith.cmpi ne, %1, %c0_i32_0 : i32
    scf.if %2 {
      %c0_116 = arith.constant 0 : index
      %c0_117 = arith.constant 0 : index
      %c0_118 = arith.constant 0 : index
      %c0_119 = arith.constant 0 : index
      %186 = vector.load %arg1[%c0_116, %c0_117, %c0_118, %c0_119] : memref<1x1x16x16xf32, #tpu.memory_space<vmem>>, vector<1x1x16x16xf32>
      %187 = vector.shape_cast %186 : vector<1x1x16x16xf32> to vector<16x16xf32>
      %c0_120 = arith.constant 0 : index
      %c0_121 = arith.constant 0 : index
      %188 = vector.load %arg6[%c0_120, %c0_121] : memref<16x16xf32, #tpu.memory_space<vmem>>, vector<16x16xf32>
      tpu.vector_store %arg6[%c0_120, %c0_121], %187 {strides = array<i32>} : memref<16x16xf32, #tpu.memory_space<vmem>>, vector<16x16xf32>,
    } else {
    }
    %c0 = arith.constant 0 : index
    %c0_1 = arith.constant 0 : index
    %c0_2 = arith.constant 0 : index
    %c0_3 = arith.constant 0 : index
    %3 = vector.load %arg3[%c0, %c0_1, %c0_2, %c0_3] : memref<1x1x16x16xf32, #tpu.memory_space<vmem>>, vector<1x1x16x16xf32>
    %4 = vector.shape_cast %3 : vector<1x1x16x16xf32> to vector<16x16xf32>
    %c0_4 = arith.constant 0 : index
    %c0_5 = arith.constant 0 : index
    %5 = vector.load %arg6[%c0_4, %c0_5] : memref<16x16xf32, #tpu.memory_space<vmem>>, vector<16x16xf32>
    %c0_6 = arith.constant 0 : index
    %c0_7 = arith.constant 0 : index
    %c0_8 = arith.constant 0 : index
    %c0_9 = arith.constant 0 : index
    %6 = vector.load %arg2[%c0_6, %c0_7, %c0_8, %c0_9] : memref<1x1x16x16xf32, #tpu.memory_space<vmem>>, vector<1x1x16x16xf32>
    %7 = vector.shape_cast %6 : vector<1x1x16x16xf32> to vector<16x16xf32>
    %8 = arith.addf %5, %7 : vector<16x16xf32>
    %9 = arith.mulf %8, %4 : vector<16x16xf32>
    %c2 = arith.constant 2 : index
    %c2_10 = arith.constant 2 : index
    %10 = vector.load %arg7[%c2, %c2_10] : memref<20x20xf32, #tpu.memory_space<vmem>>, vector<16x16xf32>
    tpu.vector_store %arg7[%c2, %c2_10], %9 {strides = array<i32>} : memref<20x20xf32, #tpu.memory_space<vmem>>, vector<16x16xf32>,
    %11 = vector.extract_strided_slice %9 {offsets = [14, 0], sizes = [2, 16], strides = [1, 1]} : vector<16x16xf32> to vector<2x16xf32>
    %c0_11 = arith.constant 0 : index
    %c2_12 = arith.constant 2 : index
    %12 = vector.load %arg7[%c0_11, %c2_12] : memref<20x20xf32, #tpu.memory_space<vmem>>, vector<2x16xf32>
    tpu.vector_store %arg7[%c0_11, %c2_12], %11 {strides = array<i32>} : memref<20x20xf32, #tpu.memory_space<vmem>>, vector<2x16xf32>,
    %13 = vector.extract_strided_slice %9 {offsets = [0, 0], sizes = [2, 16], strides = [1, 1]} : vector<16x16xf32> to vector<2x16xf32>
    %c18 = arith.constant 18 : index
    %c2_13 = arith.constant 2 : index
    %14 = vector.load %arg7[%c18, %c2_13] : memref<20x20xf32, #tpu.memory_space<vmem>>, vector<2x16xf32>
    tpu.vector_store %arg7[%c18, %c2_13], %13 {strides = array<i32>} : memref<20x20xf32, #tpu.memory_space<vmem>>, vector<2x16xf32>,
    %c0_14 = arith.constant 0 : index
    %c16 = arith.constant 16 : index
    %15 = vector.load %arg7[%c0_14, %c16] : memref<20x20xf32, #tpu.memory_space<vmem>>, vector<20x2xf32>
    %c0_15 = arith.constant 0 : index
    %c0_16 = arith.constant 0 : index
    %16 = vector.load %arg7[%c0_15, %c0_16] : memref<20x20xf32, #tpu.memory_space<vmem>>, vector<20x2xf32>
    tpu.vector_store %arg7[%c0_15, %c0_16], %15 {strides = array<i32>} : memref<20x20xf32, #tpu.memory_space<vmem>>, vector<20x2xf32>,
    %c0_17 = arith.constant 0 : index
    %c2_18 = arith.constant 2 : index
    %17 = vector.load %arg7[%c0_17, %c2_18] : memref<20x20xf32, #tpu.memory_space<vmem>>, vector<20x2xf32>
    %c0_19 = arith.constant 0 : index
    %c18_20 = arith.constant 18 : index
    %18 = vector.load %arg7[%c0_19, %c18_20] : memref<20x20xf32, #tpu.memory_space<vmem>>, vector<20x2xf32>
    tpu.vector_store %arg7[%c0_19, %c18_20], %17 {strides = array<i32>} : memref<20x20xf32, #tpu.memory_space<vmem>>, vector<20x2xf32>,
    %c0_21 = arith.constant 0 : index
    %c0_22 = arith.constant 0 : index
    %19 = vector.load %arg7[%c0_21, %c0_22] : memref<20x20xf32, #tpu.memory_space<vmem>>, vector<16x20xf32>
    %c0_23 = arith.constant 0 : index
    %c0_24 = arith.constant 0 : index
    %c0_25 = arith.constant 0 : index
    %c0_26 = arith.constant 0 : index
    %20 = vector.load %arg4[%c0_23, %c0_24, %c0_25, %c0_26] : memref<1x25x16x16xbf16, #tpu.memory_space<vmem>>, vector<1x1x16x16xbf16>
    %21 = vector.shape_cast %20 : vector<1x1x16x16xbf16> to vector<16x16xbf16>
    %22 = arith.extf %21 : vector<16x16xbf16> to vector<16x16xf32>
    %23 = vector.extract_strided_slice %19 {offsets = [0, 0], sizes = [16, 16], strides = [1, 1]} : vector<16x20xf32> to vector<16x16xf32>
    %24 = arith.mulf %23, %22 : vector<16x16xf32>
    %c0_27 = arith.constant 0 : index
    %c1 = arith.constant 1 : index
    %c0_28 = arith.constant 0 : index
    %c0_29 = arith.constant 0 : index
    %25 = vector.load %arg4[%c0_27, %c1, %c0_28, %c0_29] : memref<1x25x16x16xbf16, #tpu.memory_space<vmem>>, vector<1x1x16x16xbf16>
    %26 = vector.shape_cast %25 : vector<1x1x16x16xbf16> to vector<16x16xbf16>
    %27 = arith.extf %26 : vector<16x16xbf16> to vector<16x16xf32>
    %28 = vector.extract_strided_slice %19 {offsets = [0, 1], sizes = [16, 16], strides = [1, 1]} : vector<16x20xf32> to vector<16x16xf32>
    %29 = arith.mulf %28, %27 : vector<16x16xf32>
    %c0_30 = arith.constant 0 : index
    %c2_31 = arith.constant 2 : index
    %c0_32 = arith.constant 0 : index
    %c0_33 = arith.constant 0 : index
    %30 = vector.load %arg4[%c0_30, %c2_31, %c0_32, %c0_33] : memref<1x25x16x16xbf16, #tpu.memory_space<vmem>>, vector<1x1x16x16xbf16>
    %31 = vector.shape_cast %30 : vector<1x1x16x16xbf16> to vector<16x16xbf16>
    %32 = arith.extf %31 : vector<16x16xbf16> to vector<16x16xf32>
    %33 = vector.extract_strided_slice %19 {offsets = [0, 2], sizes = [16, 16], strides = [1, 1]} : vector<16x20xf32> to vector<16x16xf32>
    %34 = arith.mulf %33, %32 : vector<16x16xf32>
    %c0_34 = arith.constant 0 : index
    %c3 = arith.constant 3 : index
    %c0_35 = arith.constant 0 : index
    %c0_36 = arith.constant 0 : index
    %35 = vector.load %arg4[%c0_34, %c3, %c0_35, %c0_36] : memref<1x25x16x16xbf16, #tpu.memory_space<vmem>>, vector<1x1x16x16xbf16>
    %36 = vector.shape_cast %35 : vector<1x1x16x16xbf16> to vector<16x16xbf16>
    %37 = arith.extf %36 : vector<16x16xbf16> to vector<16x16xf32>
    %38 = vector.extract_strided_slice %19 {offsets = [0, 3], sizes = [16, 16], strides = [1, 1]} : vector<16x20xf32> to vector<16x16xf32>
    %39 = arith.mulf %38, %37 : vector<16x16xf32>
    %c0_37 = arith.constant 0 : index
    %c4 = arith.constant 4 : index
    %c0_38 = arith.constant 0 : index
    %c0_39 = arith.constant 0 : index
    %40 = vector.load %arg4[%c0_37, %c4, %c0_38, %c0_39] : memref<1x25x16x16xbf16, #tpu.memory_space<vmem>>, vector<1x1x16x16xbf16>
    %41 = vector.shape_cast %40 : vector<1x1x16x16xbf16> to vector<16x16xbf16>
    %42 = arith.extf %41 : vector<16x16xbf16> to vector<16x16xf32>
    %43 = vector.extract_strided_slice %19 {offsets = [0, 4], sizes = [16, 16], strides = [1, 1]} : vector<16x20xf32> to vector<16x16xf32>
    %44 = arith.mulf %43, %42 : vector<16x16xf32>
    %45 = arith.addf %24, %44 : vector<16x16xf32>
    %c1_40 = arith.constant 1 : index
    %c0_41 = arith.constant 0 : index
    %46 = vector.load %arg7[%c1_40, %c0_41] : memref<20x20xf32, #tpu.memory_space<vmem>>, vector<16x20xf32>
    %c0_42 = arith.constant 0 : index
    %c5 = arith.constant 5 : index
    %c0_43 = arith.constant 0 : index
    %c0_44 = arith.constant 0 : index
    %47 = vector.load %arg4[%c0_42, %c5, %c0_43, %c0_44] : memref<1x25x16x16xbf16, #tpu.memory_space<vmem>>, vector<1x1x16x16xbf16>
    %48 = vector.shape_cast %47 : vector<1x1x16x16xbf16> to vector<16x16xbf16>
    %49 = arith.extf %48 : vector<16x16xbf16> to vector<16x16xf32>
    %50 = vector.extract_strided_slice %46 {offsets = [0, 0], sizes = [16, 16], strides = [1, 1]} : vector<16x20xf32> to vector<16x16xf32>
    %51 = arith.mulf %50, %49 : vector<16x16xf32>
    %52 = arith.addf %29, %51 : vector<16x16xf32>
    %c0_45 = arith.constant 0 : index
    %c6 = arith.constant 6 : index
    %c0_46 = arith.constant 0 : index
    %c0_47 = arith.constant 0 : index
    %53 = vector.load %arg4[%c0_45, %c6, %c0_46, %c0_47] : memref<1x25x16x16xbf16, #tpu.memory_space<vmem>>, vector<1x1x16x16xbf16>
    %54 = vector.shape_cast %53 : vector<1x1x16x16xbf16> to vector<16x16xbf16>
    %55 = arith.extf %54 : vector<16x16xbf16> to vector<16x16xf32>
    %56 = vector.extract_strided_slice %46 {offsets = [0, 1], sizes = [16, 16], strides = [1, 1]} : vector<16x20xf32> to vector<16x16xf32>
    %57 = arith.mulf %56, %55 : vector<16x16xf32>
    %58 = arith.addf %34, %57 : vector<16x16xf32>
    %c0_48 = arith.constant 0 : index
    %c7 = arith.constant 7 : index
    %c0_49 = arith.constant 0 : index
    %c0_50 = arith.constant 0 : index
    %59 = vector.load %arg4[%c0_48, %c7, %c0_49, %c0_50] : memref<1x25x16x16xbf16, #tpu.memory_space<vmem>>, vector<1x1x16x16xbf16>
    %60 = vector.shape_cast %59 : vector<1x1x16x16xbf16> to vector<16x16xbf16>
    %61 = arith.extf %60 : vector<16x16xbf16> to vector<16x16xf32>
    %62 = vector.extract_strided_slice %46 {offsets = [0, 2], sizes = [16, 16], strides = [1, 1]} : vector<16x20xf32> to vector<16x16xf32>
    %63 = arith.mulf %62, %61 : vector<16x16xf32>
    %64 = arith.addf %39, %63 : vector<16x16xf32>
    %c0_51 = arith.constant 0 : index
    %c8 = arith.constant 8 : index
    %c0_52 = arith.constant 0 : index
    %c0_53 = arith.constant 0 : index
    %65 = vector.load %arg4[%c0_51, %c8, %c0_52, %c0_53] : memref<1x25x16x16xbf16, #tpu.memory_space<vmem>>, vector<1x1x16x16xbf16>
    %66 = vector.shape_cast %65 : vector<1x1x16x16xbf16> to vector<16x16xbf16>
    %67 = arith.extf %66 : vector<16x16xbf16> to vector<16x16xf32>
    %68 = vector.extract_strided_slice %46 {offsets = [0, 3], sizes = [16, 16], strides = [1, 1]} : vector<16x20xf32> to vector<16x16xf32>
    %69 = arith.mulf %68, %67 : vector<16x16xf32>
    %70 = arith.addf %45, %69 : vector<16x16xf32>
    %c0_54 = arith.constant 0 : index
    %c9 = arith.constant 9 : index
    %c0_55 = arith.constant 0 : index
    %c0_56 = arith.constant 0 : index
    %71 = vector.load %arg4[%c0_54, %c9, %c0_55, %c0_56] : memref<1x25x16x16xbf16, #tpu.memory_space<vmem>>, vector<1x1x16x16xbf16>
    %72 = vector.shape_cast %71 : vector<1x1x16x16xbf16> to vector<16x16xbf16>
    %73 = arith.extf %72 : vector<16x16xbf16> to vector<16x16xf32>
    %74 = vector.extract_strided_slice %46 {offsets = [0, 4], sizes = [16, 16], strides = [1, 1]} : vector<16x20xf32> to vector<16x16xf32>
    %75 = arith.mulf %74, %73 : vector<16x16xf32>
    %76 = arith.addf %52, %75 : vector<16x16xf32>
    %c2_57 = arith.constant 2 : index
    %c0_58 = arith.constant 0 : index
    %77 = vector.load %arg7[%c2_57, %c0_58] : memref<20x20xf32, #tpu.memory_space<vmem>>, vector<16x20xf32>
    %c0_59 = arith.constant 0 : index
    %c10 = arith.constant 10 : index
    %c0_60 = arith.constant 0 : index
    %c0_61 = arith.constant 0 : index
    %78 = vector.load %arg4[%c0_59, %c10, %c0_60, %c0_61] : memref<1x25x16x16xbf16, #tpu.memory_space<vmem>>, vector<1x1x16x16xbf16>
    %79 = vector.shape_cast %78 : vector<1x1x16x16xbf16> to vector<16x16xbf16>
    %80 = arith.extf %79 : vector<16x16xbf16> to vector<16x16xf32>
    %81 = vector.extract_strided_slice %77 {offsets = [0, 0], sizes = [16, 16], strides = [1, 1]} : vector<16x20xf32> to vector<16x16xf32>
    %82 = arith.mulf %81, %80 : vector<16x16xf32>
    %83 = arith.addf %58, %82 : vector<16x16xf32>
    %c0_62 = arith.constant 0 : index
    %c11 = arith.constant 11 : index
    %c0_63 = arith.constant 0 : index
    %c0_64 = arith.constant 0 : index
    %84 = vector.load %arg4[%c0_62, %c11, %c0_63, %c0_64] : memref<1x25x16x16xbf16, #tpu.memory_space<vmem>>, vector<1x1x16x16xbf16>
    %85 = vector.shape_cast %84 : vector<1x1x16x16xbf16> to vector<16x16xbf16>
    %86 = arith.extf %85 : vector<16x16xbf16> to vector<16x16xf32>
    %87 = vector.extract_strided_slice %77 {offsets = [0, 1], sizes = [16, 16], strides = [1, 1]} : vector<16x20xf32> to vector<16x16xf32>
    %88 = arith.mulf %87, %86 : vector<16x16xf32>
    %89 = arith.addf %64, %88 : vector<16x16xf32>
    %c0_65 = arith.constant 0 : index
    %c13 = arith.constant 13 : index
    %c0_66 = arith.constant 0 : index
    %c0_67 = arith.constant 0 : index
    %90 = vector.load %arg4[%c0_65, %c13, %c0_66, %c0_67] : memref<1x25x16x16xbf16, #tpu.memory_space<vmem>>, vector<1x1x16x16xbf16>
    %91 = vector.shape_cast %90 : vector<1x1x16x16xbf16> to vector<16x16xbf16>
    %92 = arith.extf %91 : vector<16x16xbf16> to vector<16x16xf32>
    %93 = vector.extract_strided_slice %77 {offsets = [0, 3], sizes = [16, 16], strides = [1, 1]} : vector<16x20xf32> to vector<16x16xf32>
    %94 = arith.mulf %93, %92 : vector<16x16xf32>
    %95 = arith.addf %70, %94 : vector<16x16xf32>
    %c0_68 = arith.constant 0 : index
    %c14 = arith.constant 14 : index
    %c0_69 = arith.constant 0 : index
    %c0_70 = arith.constant 0 : index
    %96 = vector.load %arg4[%c0_68, %c14, %c0_69, %c0_70] : memref<1x25x16x16xbf16, #tpu.memory_space<vmem>>, vector<1x1x16x16xbf16>
    %97 = vector.shape_cast %96 : vector<1x1x16x16xbf16> to vector<16x16xbf16>
    %98 = arith.extf %97 : vector<16x16xbf16> to vector<16x16xf32>
    %99 = vector.extract_strided_slice %77 {offsets = [0, 4], sizes = [16, 16], strides = [1, 1]} : vector<16x20xf32> to vector<16x16xf32>
    %100 = arith.mulf %99, %98 : vector<16x16xf32>
    %101 = arith.addf %76, %100 : vector<16x16xf32>
    %c3_71 = arith.constant 3 : index
    %c0_72 = arith.constant 0 : index
    %102 = vector.load %arg7[%c3_71, %c0_72] : memref<20x20xf32, #tpu.memory_space<vmem>>, vector<16x20xf32>
    %c0_73 = arith.constant 0 : index
    %c15 = arith.constant 15 : index
    %c0_74 = arith.constant 0 : index
    %c0_75 = arith.constant 0 : index
    %103 = vector.load %arg4[%c0_73, %c15, %c0_74, %c0_75] : memref<1x25x16x16xbf16, #tpu.memory_space<vmem>>, vector<1x1x16x16xbf16>
    %104 = vector.shape_cast %103 : vector<1x1x16x16xbf16> to vector<16x16xbf16>
    %105 = arith.extf %104 : vector<16x16xbf16> to vector<16x16xf32>
    %106 = vector.extract_strided_slice %102 {offsets = [0, 0], sizes = [16, 16], strides = [1, 1]} : vector<16x20xf32> to vector<16x16xf32>
    %107 = arith.mulf %106, %105 : vector<16x16xf32>
    %108 = arith.addf %83, %107 : vector<16x16xf32>
    %c0_76 = arith.constant 0 : index
    %c16_77 = arith.constant 16 : index
    %c0_78 = arith.constant 0 : index
    %c0_79 = arith.constant 0 : index
    %109 = vector.load %arg4[%c0_76, %c16_77, %c0_78, %c0_79] : memref<1x25x16x16xbf16, #tpu.memory_space<vmem>>, vector<1x1x16x16xbf16>
    %110 = vector.shape_cast %109 : vector<1x1x16x16xbf16> to vector<16x16xbf16>
    %111 = arith.extf %110 : vector<16x16xbf16> to vector<16x16xf32>
    %112 = vector.extract_strided_slice %102 {offsets = [0, 1], sizes = [16, 16], strides = [1, 1]} : vector<16x20xf32> to vector<16x16xf32>
    %113 = arith.mulf %112, %111 : vector<16x16xf32>
    %114 = arith.addf %89, %113 : vector<16x16xf32>
    %c0_80 = arith.constant 0 : index
    %c17 = arith.constant 17 : index
    %c0_81 = arith.constant 0 : index
    %c0_82 = arith.constant 0 : index
    %115 = vector.load %arg4[%c0_80, %c17, %c0_81, %c0_82] : memref<1x25x16x16xbf16, #tpu.memory_space<vmem>>, vector<1x1x16x16xbf16>
    %116 = vector.shape_cast %115 : vector<1x1x16x16xbf16> to vector<16x16xbf16>
    %117 = arith.extf %116 : vector<16x16xbf16> to vector<16x16xf32>
    %118 = vector.extract_strided_slice %102 {offsets = [0, 2], sizes = [16, 16], strides = [1, 1]} : vector<16x20xf32> to vector<16x16xf32>
    %119 = arith.mulf %118, %117 : vector<16x16xf32>
    %120 = arith.addf %95, %119 : vector<16x16xf32>
    %c0_83 = arith.constant 0 : index
    %c18_84 = arith.constant 18 : index
    %c0_85 = arith.constant 0 : index
    %c0_86 = arith.constant 0 : index
    %121 = vector.load %arg4[%c0_83, %c18_84, %c0_85, %c0_86] : memref<1x25x16x16xbf16, #tpu.memory_space<vmem>>, vector<1x1x16x16xbf16>
    %122 = vector.shape_cast %121 : vector<1x1x16x16xbf16> to vector<16x16xbf16>
    %123 = arith.extf %122 : vector<16x16xbf16> to vector<16x16xf32>
    %124 = vector.extract_strided_slice %102 {offsets = [0, 3], sizes = [16, 16], strides = [1, 1]} : vector<16x20xf32> to vector<16x16xf32>
    %125 = arith.mulf %124, %123 : vector<16x16xf32>
    %126 = arith.addf %101, %125 : vector<16x16xf32>
    %c0_87 = arith.constant 0 : index
    %c19 = arith.constant 19 : index
    %c0_88 = arith.constant 0 : index
    %c0_89 = arith.constant 0 : index
    %127 = vector.load %arg4[%c0_87, %c19, %c0_88, %c0_89] : memref<1x25x16x16xbf16, #tpu.memory_space<vmem>>, vector<1x1x16x16xbf16>
    %128 = vector.shape_cast %127 : vector<1x1x16x16xbf16> to vector<16x16xbf16>
    %129 = arith.extf %128 : vector<16x16xbf16> to vector<16x16xf32>
    %130 = vector.extract_strided_slice %102 {offsets = [0, 4], sizes = [16, 16], strides = [1, 1]} : vector<16x20xf32> to vector<16x16xf32>
    %131 = arith.mulf %130, %129 : vector<16x16xf32>
    %132 = arith.addf %108, %131 : vector<16x16xf32>
    %c4_90 = arith.constant 4 : index
    %c0_91 = arith.constant 0 : index
    %133 = vector.load %arg7[%c4_90, %c0_91] : memref<20x20xf32, #tpu.memory_space<vmem>>, vector<16x20xf32>
    %c0_92 = arith.constant 0 : index
    %c20 = arith.constant 20 : index
    %c0_93 = arith.constant 0 : index
    %c0_94 = arith.constant 0 : index
    %134 = vector.load %arg4[%c0_92, %c20, %c0_93, %c0_94] : memref<1x25x16x16xbf16, #tpu.memory_space<vmem>>, vector<1x1x16x16xbf16>
    %135 = vector.shape_cast %134 : vector<1x1x16x16xbf16> to vector<16x16xbf16>
    %136 = arith.extf %135 : vector<16x16xbf16> to vector<16x16xf32>
    %137 = vector.extract_strided_slice %133 {offsets = [0, 0], sizes = [16, 16], strides = [1, 1]} : vector<16x20xf32> to vector<16x16xf32>
    %138 = arith.mulf %137, %136 : vector<16x16xf32>
    %139 = arith.addf %114, %138 : vector<16x16xf32>
    %c0_95 = arith.constant 0 : index
    %c21 = arith.constant 21 : index
    %c0_96 = arith.constant 0 : index
    %c0_97 = arith.constant 0 : index
    %140 = vector.load %arg4[%c0_95, %c21, %c0_96, %c0_97] : memref<1x25x16x16xbf16, #tpu.memory_space<vmem>>, vector<1x1x16x16xbf16>
    %141 = vector.shape_cast %140 : vector<1x1x16x16xbf16> to vector<16x16xbf16>
    %142 = arith.extf %141 : vector<16x16xbf16> to vector<16x16xf32>
    %143 = vector.extract_strided_slice %133 {offsets = [0, 1], sizes = [16, 16], strides = [1, 1]} : vector<16x20xf32> to vector<16x16xf32>
    %144 = arith.mulf %143, %142 : vector<16x16xf32>
    %145 = arith.addf %120, %144 : vector<16x16xf32>
    %c0_98 = arith.constant 0 : index
    %c22 = arith.constant 22 : index
    %c0_99 = arith.constant 0 : index
    %c0_100 = arith.constant 0 : index
    %146 = vector.load %arg4[%c0_98, %c22, %c0_99, %c0_100] : memref<1x25x16x16xbf16, #tpu.memory_space<vmem>>, vector<1x1x16x16xbf16>
    %147 = vector.shape_cast %146 : vector<1x1x16x16xbf16> to vector<16x16xbf16>
    %148 = arith.extf %147 : vector<16x16xbf16> to vector<16x16xf32>
    %149 = vector.extract_strided_slice %133 {offsets = [0, 2], sizes = [16, 16], strides = [1, 1]} : vector<16x20xf32> to vector<16x16xf32>
    %150 = arith.mulf %149, %148 : vector<16x16xf32>
    %151 = arith.addf %126, %150 : vector<16x16xf32>
    %c0_101 = arith.constant 0 : index
    %c23 = arith.constant 23 : index
    %c0_102 = arith.constant 0 : index
    %c0_103 = arith.constant 0 : index
    %152 = vector.load %arg4[%c0_101, %c23, %c0_102, %c0_103] : memref<1x25x16x16xbf16, #tpu.memory_space<vmem>>, vector<1x1x16x16xbf16>
    %153 = vector.shape_cast %152 : vector<1x1x16x16xbf16> to vector<16x16xbf16>
    %154 = arith.extf %153 : vector<16x16xbf16> to vector<16x16xf32>
    %155 = vector.extract_strided_slice %133 {offsets = [0, 3], sizes = [16, 16], strides = [1, 1]} : vector<16x20xf32> to vector<16x16xf32>
    %156 = arith.mulf %155, %154 : vector<16x16xf32>
    %157 = arith.addf %132, %156 : vector<16x16xf32>
    %c0_104 = arith.constant 0 : index
    %c24 = arith.constant 24 : index
    %c0_105 = arith.constant 0 : index
    %c0_106 = arith.constant 0 : index
    %158 = vector.load %arg4[%c0_104, %c24, %c0_105, %c0_106] : memref<1x25x16x16xbf16, #tpu.memory_space<vmem>>, vector<1x1x16x16xbf16>
    %159 = vector.shape_cast %158 : vector<1x1x16x16xbf16> to vector<16x16xbf16>
    %160 = arith.extf %159 : vector<16x16xbf16> to vector<16x16xf32>
    %161 = vector.extract_strided_slice %133 {offsets = [0, 4], sizes = [16, 16], strides = [1, 1]} : vector<16x20xf32> to vector<16x16xf32>
    %162 = arith.mulf %161, %160 : vector<16x16xf32>
    %163 = arith.addf %139, %162 : vector<16x16xf32>
    %164 = arith.addf %145, %151 : vector<16x16xf32>
    %165 = arith.addf %157, %163 : vector<16x16xf32>
    %166 = arith.addf %164, %165 : vector<16x16xf32>
    %cst = arith.constant 5.000000e-01 : f32
    %167 = vector.broadcast %cst : f32 to vector<16x16xf32>
    %168 = arith.mulf %167, %166 : vector<16x16xf32>
    %169 = math.tanh %168 : vector<16x16xf32>
    %cst_107 = arith.constant 1.000000e+00 : f32
    %170 = vector.broadcast %cst_107 : f32 to vector<16x16xf32>
    %171 = arith.addf %169, %170 : vector<16x16xf32>
    %cst_108 = arith.constant 5.000000e-01 : f32
    %172 = vector.broadcast %cst_108 : f32 to vector<16x16xf32>
    %173 = arith.mulf %172, %171 : vector<16x16xf32>
    %cst_109 = arith.constant 0.949999988 : f32
    %174 = vector.broadcast %cst_109 : f32 to vector<16x16xf32>
    %175 = arith.mulf %174, %8 : vector<16x16xf32>
    %cst_110 = arith.constant 1.000000e+00 : f32
    %176 = vector.broadcast %cst_110 : f32 to vector<16x16xf32>
    %177 = arith.subf %176, %8 : vector<16x16xf32>
    %cst_111 = arith.constant 5.000000e-02 : f32
    %178 = vector.broadcast %cst_111 : f32 to vector<16x16xf32>
    %179 = arith.mulf %178, %177 : vector<16x16xf32>
    %180 = arith.mulf %179, %173 : vector<16x16xf32>
    %181 = arith.addf %175, %180 : vector<16x16xf32>
    %c0_112 = arith.constant 0 : index
    %c0_113 = arith.constant 0 : index
    %182 = vector.load %arg6[%c0_112, %c0_113] : memref<16x16xf32, #tpu.memory_space<vmem>>, vector<16x16xf32>
    tpu.vector_store %arg6[%c0_112, %c0_113], %181 {strides = array<i32>} : memref<16x16xf32, #tpu.memory_space<vmem>>, vector<16x16xf32>,
    %c0_i32_114 = arith.constant 0 : i32
    %183 = arith.cmpi eq, %arg0, %c0_i32_114 : i32
    %184 = arith.extui %183 : i1 to i32
    %c0_i32_115 = arith.constant 0 : i32
    %185 = arith.cmpi ne, %184, %c0_i32_115 : i32
    scf.if %185 {
      %c0_116 = arith.constant 0 : index
      %c0_117 = arith.constant 0 : index
      %c0_118 = arith.constant 0 : index
      %186 = vector.load %arg5[%c0_116, %c0_117, %c0_118] : memref<2x16x16xf32, #tpu.memory_space<vmem>>, vector<1x16x16xf32>
      %187 = vector.shape_cast %186 : vector<1x16x16xf32> to vector<16x16xf32>
      %188 = vector.shape_cast %181 : vector<16x16xf32> to vector<1x16x16xf32>
      tpu.vector_store %arg5[%c0_116, %c0_117, %c0_118], %188 {strides = array<i32>} : memref<2x16x16xf32, #tpu.memory_space<vmem>>, vector<1x16x16xf32>,
      %c1_119 = arith.constant 1 : index
      %c0_120 = arith.constant 0 : index
      %c0_121 = arith.constant 0 : index
      %189 = vector.load %arg5[%c1_119, %c0_120, %c0_121] : memref<2x16x16xf32, #tpu.memory_space<vmem>>, vector<1x16x16xf32>
      %190 = vector.shape_cast %189 : vector<1x16x16xf32> to vector<16x16xf32>
      %191 = vector.shape_cast %4 : vector<16x16xf32> to vector<1x16x16xf32>
      tpu.vector_store %arg5[%c1_119, %c0_120, %c0_121], %191 {strides = array<i32>} : memref<2x16x16xf32, #tpu.memory_space<vmem>>, vector<1x16x16xf32>,
    } else {
    }
    return
  }
  func.func @transform_0(%arg0: i32) -> (i32, i32, i32, i32) {
    %c0_i32 = arith.constant 0 : i32
    %c0_i32_0 = arith.constant 0 : i32
    %c0_i32_1 = arith.constant 0 : i32
    %c0_i32_2 = arith.constant 0 : i32
    %c0_i32_3 = arith.constant 0 : i32
    return %c0_i32, %c0_i32_0, %c0_i32_1, %c0_i32_2 : i32, i32, i32, i32
  }
  func.func @transform_1(%arg0: i32) -> (i32, i32, i32, i32) {
    %c0_i32 = arith.constant 0 : i32
    %c0_i32_0 = arith.constant 0 : i32
    %c0_i32_1 = arith.constant 0 : i32
    %c0_i32_2 = arith.constant 0 : i32
    return %arg0, %c0_i32, %c0_i32_0, %c0_i32_1 : i32, i32, i32, i32
  }
  func.func @transform_2(%arg0: i32) -> (i32, i32, i32, i32) {
    %c0_i32 = arith.constant 0 : i32
    %c0_i32_0 = arith.constant 0 : i32
    %c0_i32_1 = arith.constant 0 : i32
    %c0_i32_2 = arith.constant 0 : i32
    %c0_i32_3 = arith.constant 0 : i32
    return %c0_i32, %c0_i32_0, %c0_i32_1, %c0_i32_2 : i32, i32, i32, i32
  }
  func.func @transform_3(%arg0: i32) -> (i32, i32, i32, i32) {
    %c0_i32 = arith.constant 0 : i32
    %c0_i32_0 = arith.constant 0 : i32
    %c0_i32_1 = arith.constant 0 : i32
    %c0_i32_2 = arith.constant 0 : i32
    %c0_i32_3 = arith.constant 0 : i32
    return %c0_i32, %c0_i32_0, %c0_i32_1, %c0_i32_2 : i32, i32, i32, i32
  }
  func.func @transform_4(%arg0: i32) -> (i32, i32, i32) {
    %c0_i32 = arith.constant 0 : i32
    %c0_i32_0 = arith.constant 0 : i32
    %c0_i32_1 = arith.constant 0 : i32
    %c0_i32_2 = arith.constant 0 : i32
    return %c0_i32, %c0_i32_0, %c0_i32_1 : i32, i32, i32
  }
}

</mosaic_0001>

<llo_original>
// kernel: rule_forward.1
$region0: #{rule_forward.1}
  #allocation0 [shape = 'u32[]', space=smem, size = 0x4, offset = 0x4, fixed_abs, tag = 'smem constant byte address 0x4 - core index']
  #allocation1 [shape = 'u32[144,128]{1,0:T(1,128)}', space=vmem, size = 0x12000, scoped, tag = 'internal scratch']
  #allocation2 [shape = 'f32[16,16]{1,0:T(8,128)}', space=vmem, size = 0x2000, scoped, tag = 'scratch operand']
  #allocation3 [shape = 'f32[20,20]{1,0:T(8,128)}', space=vmem, size = 0x3000, scoped, tag = 'scratch operand']
  %s0 = inlined_call_operand.vmem [shape: f32[1,2,16,16], index: 0, kind: input, shape index: {}]
  %s1 = inlined_call_operand.vmem [shape: f32[1,1,16,16], index: 1, kind: input, shape index: {}]
  %s2 = inlined_call_operand.vmem [shape: f32[1,1,16,16], index: 2, kind: input, shape index: {}]
  %s3 = inlined_call_operand.vmem [shape: bf16[1,25,16,16], index: 3, kind: input, shape index: {}]
  %s4 = inlined_call_operand.hbm [shape: f32[2,16,16], index: 4, kind: output, shape index: {}]
  %s5 = sld [smem:[#allocation0]]
  $region34: #{rule_forward.1} parent=0
    _
  %s7 = ssub.s32 1, %s5
  %s8 = scalar_select 0, %s7, %s5
  $region1: #{rule_forward.1} parent=0
    #allocation4 [shape = 'u8[16384]{0}', space=vmem, size = 0x4000, scoped, tag = 'output window, operand 0, single buffered']
    #allocation5 [shape = 's32[1]{0}', space=sflag, size = 0x4, scoped, tag = 'scoped memory for rule_forward.1']
    %9 = vsyncpa [#allocation5], 0
    // Predicated region
    $region2: #{rule_forward.1} parent=1 // pred_check
      _
    $region3: #{rule_forward.1} parent=1 // pred_check_branch
      %11 = sbr.rel (0) target = $region5
    $region4: #{rule_forward.1} parent=1 // pred_region
      _
    $region5: #{rule_forward.1} parent=1 // pred_fallthru
      _
    // Predicated region
    $region6: #{rule_forward.1} parent=1 // pred_check
      _
    $region7: #{rule_forward.1} parent=1 // pred_check_branch
      %13 = sbr.rel (0) target = $region9
    $region8: #{rule_forward.1} parent=1 // pred_region
      _
    $region9: #{rule_forward.1} parent=1 // pred_fallthru
      _
    // Predicated region
    $region10: #{rule_forward.1} parent=1 // pred_check
      _
    $region11: #{rule_forward.1} parent=1 // pred_check_branch
      %15 = sbr.rel (0) target = $region13
    $region12: #{rule_forward.1} parent=1 // pred_region
      _
    $region13: #{rule_forward.1} parent=1 // pred_fallthru
      _
    // Predicated region
    $region14: #{rule_forward.1} parent=1 // pred_check
      _
    $region15: #{rule_forward.1} parent=1 // pred_check_branch
      %17 = sbr.rel (0) target = $region17
    $region16: #{rule_forward.1} parent=1 // pred_region
      _
    $region17: #{rule_forward.1} parent=1 // pred_fallthru
      _
    %p18 = scmp.eq.s32.totalorder 0, 0
    // Predicated region
    $region18: #{rule_forward.1} parent=1 // pred_check
      %p19 = pneg %p18
    $region19: #{rule_forward.1} parent=1 // pred_check_branch
      %21 = sbr.rel (%p19) target = $region21
    $region20: #{rule_forward.1} parent=1 // pred_region
      %v22 = vld [vmem:[%s0] sm:$0xff]
      %v23 = vld [vmem:[%s0 + $0x8] sm:$0xff]
      %vm24 = vcmask 130048
      %25 = vst.msk [vmem:[#allocation2] sm:$0xff] %vm24, %v22
      %26 = vst.msk [vmem:[#allocation2 + $0x8] sm:$0xff] %vm24, %v23
    $region21: #{rule_forward.1} parent=1 // pred_fallthru
      _
    %v27 = vld [vmem:[%s2] sm:$0xff]
    %v28 = vld [vmem:[%s2 + $0x8] sm:$0xff]
    %v29 = vld [vmem:[#allocation2] sm:$0xff]
    %v30 = vld [vmem:[#allocation2 + $0x8] sm:$0xff]
    %v31 = vld [vmem:[%s1] sm:$0xff]
    %v32 = vld [vmem:[%s1 + $0x8] sm:$0xff]
    %v33 = vadd.f32 %v29, %v31
    %v34 = vadd.f32 %v30, %v32
    %v35 = vmul.f32 %v33, %v27
    %v36 = vmul.f32 %v34, %v28
    %39 = vrot.lane.b32.xlu0 %v35, 2
    %v40 = vpop.permute.xlu0 %39
    %41 = vrot.lane.b32.xlu0 %v36, 2
    %v42 = vpop.permute.xlu0 %41
    %vm45 = vcmask 146448
    %46 = vst.msk [vmem:[#allocation3 + $0x2] sm:$0xff] %vm45, %v40
    %47 = vst.msk [vmem:[#allocation3 + $0xa] sm:$0xff] %vm45, %v42
    %vm48 = vcmask 146454
    %49 = vst.msk [vmem:[#allocation3 - $0x6] sm:$0xc0] %vm48, %v42
    %vm50 = vcmask 140304
    %51 = vst.msk [vmem:[#allocation3 + $0x12] sm:$0x3] %vm50, %v40
    %v52 = vld [vmem:[#allocation3] sm:$0xff]
    %v53 = vld [vmem:[#allocation3 + $0x8] sm:$0xff]
    %v54 = vld [vmem:[#allocation3 + $0x10] sm:$0xf]
    %58 = vrot.lane.b32.xlu0 %v52, 112
    %v59 = vpop.permute.xlu0 %58
    %60 = vrot.lane.b32.xlu0 %v53, 112
    %v61 = vpop.permute.xlu0 %60
    %62 = vrot.lane.b32.xlu0 %v54, 112
    %v63 = vpop.permute.xlu0 %62
    %vm67 = vcmask 15360
    %68 = vst.msk [vmem:[#allocation3] sm:$0xff] %vm67, %v59
    %69 = vst.msk [vmem:[#allocation3 + $0x8] sm:$0xff] %vm67, %v61
    %vm70 = vcmask 11264
    %71 = vst.msk [vmem:[#allocation3 + $0x10] sm:$0xf] %vm70, %v63
    %v72 = vld [vmem:[#allocation3] sm:$0xff]
    %v73 = vld [vmem:[#allocation3 + $0x8] sm:$0xff]
    %v74 = vld [vmem:[#allocation3 + $0x10] sm:$0xf]
    %78 = vrot.lane.b32.xlu0 %v72, 16
    %v79 = vpop.permute.xlu0 %78
    %80 = vrot.lane.b32.xlu0 %v73, 16
    %v81 = vpop.permute.xlu0 %80
    %82 = vrot.lane.b32.xlu0 %v74, 16
    %v83 = vpop.permute.xlu0 %82
    %vm87 = vcmask 162960
    %88 = vst.msk [vmem:[#allocation3] sm:$0xff] %vm87, %v79
    %89 = vst.msk [vmem:[#allocation3 + $0x8] sm:$0xff] %vm87, %v81
    %vm90 = vcmask 158864
    %91 = vst.msk [vmem:[#allocation3 + $0x10] sm:$0xf] %vm90, %v83
    %v92 = vld [vmem:[#allocation3] sm:$0xff]
    %v93 = vld [vmem:[#allocation3 + $0x8] sm:$0xff]
    %v94 = vld [vmem:[%s3] sm:$0xf]
    %v95 = vld [vmem:[%s3 + $0x4] sm:$0xf]
    %v96 = vunpack.c.l.bf16 %v94
    %v97 = vunpack.c.l.bf16 %v95
    %v98 = vmul.f32 %v92, %v96
    %v99 = vmul.f32 %v93, %v97
    %s100 = scalar_lea.vmem %s3, 8
    %v101 = vld [vmem:[%s100] sm:$0xf]
    %v102 = vld [vmem:[%s100 + $0x4] sm:$0xf]
    %v103 = vunpack.c.l.bf16 %v101
    %v104 = vunpack.c.l.bf16 %v102
    %107 = vrot.lane.b32.xlu0 %v103, 1
    %v108 = vpop.permute.xlu0 %107
    %109 = vrot.lane.b32.xlu0 %v104, 1
    %v110 = vpop.permute.xlu0 %109
    %v113 = vmul.f32 %v92, %v108
    %v114 = vmul.f32 %v93, %v110
    %s115 = scalar_lea.vmem %s3, 16
    %v116 = vld [vmem:[%s115] sm:$0xf]
    %v117 = vld [vmem:[%s115 + $0x4] sm:$0xf]
    %v118 = vunpack.c.l.bf16 %v116
    %v119 = vunpack.c.l.bf16 %v117
    %122 = vrot.lane.b32.xlu0 %v118, 2
    %v123 = vpop.permute.xlu0 %122
    %124 = vrot.lane.b32.xlu0 %v119, 2
    %v125 = vpop.permute.xlu0 %124
    %v128 = vmul.f32 %v92, %v123
    %v129 = vmul.f32 %v93, %v125
    %s130 = scalar_lea.vmem %s3, 24
    %v131 = vld [vmem:[%s130] sm:$0xf]
    %v132 = vld [vmem:[%s130 + $0x4] sm:$0xf]
    %v133 = vunpack.c.l.bf16 %v131
    %v134 = vunpack.c.l.bf16 %v132
    %137 = vrot.lane.b32.xlu0 %v133, 3
    %v138 = vpop.permute.xlu0 %137
    %139 = vrot.lane.b32.xlu0 %v134, 3
    %v140 = vpop.permute.xlu0 %139
    %v143 = vmul.f32 %v92, %v138
    %v144 = vmul.f32 %v93, %v140
    %s145 = scalar_lea.vmem %s3, 32
    %v146 = vld [vmem:[%s145] sm:$0xf]
    %v147 = vld [vmem:[%s145 + $0x4] sm:$0xf]
    %v148 = vunpack.c.l.bf16 %v146
    %v149 = vunpack.c.l.bf16 %v147
    %152 = vrot.lane.b32.xlu0 %v148, 4
    %v153 = vpop.permute.xlu0 %152
    %154 = vrot.lane.b32.xlu0 %v149, 4
    %v155 = vpop.permute.xlu0 %154
    %v158 = vmul.f32 %v92, %v153
    %v159 = vmul.f32 %v93, %v155
    %162 = vrot.lane.b32.xlu0 %v158, 124
    %v163 = vpop.permute.xlu0 %162
    %164 = vrot.lane.b32.xlu0 %v159, 124
    %v165 = vpop.permute.xlu0 %164
    %v168 = vadd.f32 %v98, %v163
    %v169 = vadd.f32 %v99, %v165
    %v170 = vld [vmem:[#allocation3 + $0x1] sm:$0xff]
    %v171 = vld [vmem:[#allocation3 + $0x9] sm:$0xff]
    %s172 = scalar_lea.vmem %s3, 40
    %v173 = vld [vmem:[%s172] sm:$0xf]
    %v174 = vld [vmem:[%s172 + $0x4] sm:$0xf]
    %v175 = vunpack.c.l.bf16 %v173
    %v176 = vunpack.c.l.bf16 %v174
    %v177 = vmul.f32 %v170, %v175
    %v178 = vmul.f32 %v171, %v176
    %181 = vrot.lane.b32.xlu0 %v177, 1
    %v182 = vpop.permute.xlu0 %181
    %183 = vrot.lane.b32.xlu0 %v178, 1
    %v184 = vpop.permute.xlu0 %183
    %v187 = vadd.f32 %v113, %v182
    %v188 = vadd.f32 %v114, %v184
    %s189 = scalar_lea.vmem %s3, 48
    %v190 = vld [vmem:[%s189] sm:$0xf]
    %v191 = vld [vmem:[%s189 + $0x4] sm:$0xf]
    %v192 = vunpack.c.l.bf16 %v190
    %v193 = vunpack.c.l.bf16 %v191
    %196 = vrot.lane.b32.xlu0 %v192, 1
    %v197 = vpop.permute.xlu0 %196
    %198 = vrot.lane.b32.xlu0 %v193, 1
    %v199 = vpop.permute.xlu0 %198
    %v202 = vmul.f32 %v170, %v197
    %v203 = vmul.f32 %v171, %v199
    %206 = vrot.lane.b32.xlu0 %v202, 1
    %v207 = vpop.permute.xlu0 %206
    %208 = vrot.lane.b32.xlu0 %v203, 1
    %v209 = vpop.permute.xlu0 %208
    %v212 = vadd.f32 %v128, %v207
    %v213 = vadd.f32 %v129, %v209
    %s214 = scalar_lea.vmem %s3, 56
    %v215 = vld [vmem:[%s214] sm:$0xf]
    %v216 = vld [vmem:[%s214 + $0x4] sm:$0xf]
    %v217 = vunpack.c.l.bf16 %v215
    %v218 = vunpack.c.l.bf16 %v216
    %221 = vrot.lane.b32.xlu0 %v217, 2
    %v222 = vpop.permute.xlu0 %221
    %223 = vrot.lane.b32.xlu0 %v218, 2
    %v224 = vpop.permute.xlu0 %223
    %v227 = vmul.f32 %v170, %v222
    %v228 = vmul.f32 %v171, %v224
    %231 = vrot.lane.b32.xlu0 %v227, 1
    %v232 = vpop.permute.xlu0 %231
    %233 = vrot.lane.b32.xlu0 %v228, 1
    %v234 = vpop.permute.xlu0 %233
    %v237 = vadd.f32 %v143, %v232
    %v238 = vadd.f32 %v144, %v234
    %s239 = scalar_lea.vmem %s3, 64
    %v240 = vld [vmem:[%s239] sm:$0xf]
    %v241 = vld [vmem:[%s239 + $0x4] sm:$0xf]
    %v242 = vunpack.c.l.bf16 %v240
    %v243 = vunpack.c.l.bf16 %v241
    %246 = vrot.lane.b32.xlu0 %v242, 3
    %v247 = vpop.permute.xlu0 %246
    %248 = vrot.lane.b32.xlu0 %v243, 3
    %v249 = vpop.permute.xlu0 %248
    %v252 = vmul.f32 %v170, %v247
    %v253 = vmul.f32 %v171, %v249
    %256 = vrot.lane.b32.xlu0 %v252, 125
    %v257 = vpop.permute.xlu0 %256
    %258 = vrot.lane.b32.xlu0 %v253, 125
    %v259 = vpop.permute.xlu0 %258
    %v262 = vadd.f32 %v168, %v257
    %v263 = vadd.f32 %v169, %v259
    %s264 = scalar_lea.vmem %s3, 72
    %v265 = vld [vmem:[%s264] sm:$0xf]
    %v266 = vld [vmem:[%s264 + $0x4] sm:$0xf]
    %v267 = vunpack.c.l.bf16 %v265
    %v268 = vunpack.c.l.bf16 %v266
    %271 = vrot.lane.b32.xlu0 %v267, 4
    %v272 = vpop.permute.xlu0 %271
    %273 = vrot.lane.b32.xlu0 %v268, 4
    %v274 = vpop.permute.xlu0 %273
    %v277 = vmul.f32 %v170, %v272
    %v278 = vmul.f32 %v171, %v274
    %281 = vrot.lane.b32.xlu0 %v277, 125
    %v282 = vpop.permute.xlu0 %281
    %283 = vrot.lane.b32.xlu0 %v278, 125
    %v284 = vpop.permute.xlu0 %283
    %v287 = vadd.f32 %v187, %v282
    %v288 = vadd.f32 %v188, %v284
    %v289 = vld [vmem:[#allocation3 + $0x2] sm:$0xff]
    %v290 = vld [vmem:[#allocation3 + $0xa] sm:$0xff]
    %s291 = scalar_lea.vmem %s3, 80
    %v292 = vld [vmem:[%s291] sm:$0xf]
    %v293 = vld [vmem:[%s291 + $0x4] sm:$0xf]
    %v294 = vunpack.c.l.bf16 %v292
    %v295 = vunpack.c.l.bf16 %v293
    %v296 = vmul.f32 %v289, %v294
    %v297 = vmul.f32 %v290, %v295
    %300 = vrot.lane.b32.xlu0 %v296, 2
    %v301 = vpop.permute.xlu0 %300
    %302 = vrot.lane.b32.xlu0 %v297, 2
    %v303 = vpop.permute.xlu0 %302
    %v306 = vadd.f32 %v212, %v301
    %v307 = vadd.f32 %v213, %v303
    %s308 = scalar_lea.vmem %s3, 88
    %v309 = vld [vmem:[%s308] sm:$0xf]
    %v310 = vld [vmem:[%s308 + $0x4] sm:$0xf]
    %v311 = vunpack.c.l.bf16 %v309
    %v312 = vunpack.c.l.bf16 %v310
    %315 = vrot.lane.b32.xlu0 %v311, 1
    %v316 = vpop.permute.xlu0 %315
    %317 = vrot.lane.b32.xlu0 %v312, 1
    %v318 = vpop.permute.xlu0 %317
    %v321 = vmul.f32 %v289, %v316
    %v322 = vmul.f32 %v290, %v318
    %325 = vrot.lane.b32.xlu0 %v321, 2
    %v326 = vpop.permute.xlu0 %325
    %327 = vrot.lane.b32.xlu0 %v322, 2
    %v328 = vpop.permute.xlu0 %327
    %v331 = vadd.f32 %v237, %v326
    %v332 = vadd.f32 %v238, %v328
    %s333 = scalar_lea.vmem %s3, 104
    %v334 = vld [vmem:[%s333] sm:$0xf]
    %v335 = vld [vmem:[%s333 + $0x4] sm:$0xf]
    %v336 = vunpack.c.l.bf16 %v334
    %v337 = vunpack.c.l.bf16 %v335
    %340 = vrot.lane.b32.xlu0 %v336, 3
    %v341 = vpop.permute.xlu0 %340
    %342 = vrot.lane.b32.xlu0 %v337, 3
    %v343 = vpop.permute.xlu0 %342
    %v346 = vmul.f32 %v289, %v341
    %v347 = vmul.f32 %v290, %v343
    %350 = vrot.lane.b32.xlu0 %v346, 125
    %v351 = vpop.permute.xlu0 %350
    %352 = vrot.lane.b32.xlu0 %v347, 125
    %v353 = vpop.permute.xlu0 %352
    %v356 = vadd.f32 %v262, %v351
    %v357 = vadd.f32 %v263, %v353
    %s358 = scalar_lea.vmem %s3, 112
    %v359 = vld [vmem:[%s358] sm:$0xf]
    %v360 = vld [vmem:[%s358 + $0x4] sm:$0xf]
    %v361 = vunpack.c.l.bf16 %v359
    %v362 = vunpack.c.l.bf16 %v360
    %365 = vrot.lane.b32.xlu0 %v361, 4
    %v366 = vpop.permute.xlu0 %365
    %367 = vrot.lane.b32.xlu0 %v362, 4
    %v368 = vpop.permute.xlu0 %367
    %v371 = vmul.f32 %v289, %v366
    %v372 = vmul.f32 %v290, %v368
    %375 = vrot.lane.b32.xlu0 %v371, 125
    %v376 = vpop.permute.xlu0 %375
    %377 = vrot.lane.b32.xlu0 %v372, 125
    %v378 = vpop.permute.xlu0 %377
    %v381 = vadd.f32 %v287, %v376
    %v382 = vadd.f32 %v288, %v378
    %v383 = vld [vmem:[#allocation3 + $0x3] sm:$0xff]
    %v384 = vld [vmem:[#allocation3 + $0xb] sm:$0xff]
    %s385 = scalar_lea.vmem %s3, 120
    %v386 = vld [vmem:[%s385] sm:$0xf]
    %v387 = vld [vmem:[%s385 + $0x4] sm:$0xf]
    %v388 = vunpack.c.l.bf16 %v386
    %v389 = vunpack.c.l.bf16 %v387
    %v390 = vmul.f32 %v383, %v388
    %v391 = vmul.f32 %v384, %v389
    %394 = vrot.lane.b32.xlu0 %v390, 2
    %v395 = vpop.permute.xlu0 %394
    %396 = vrot.lane.b32.xlu0 %v391, 2
    %v397 = vpop.permute.xlu0 %396
    %v400 = vadd.f32 %v306, %v395
    %v401 = vadd.f32 %v307, %v397
    %s402 = scalar_lea.vmem %s3, 128
    %v403 = vld [vmem:[%s402] sm:$0xf]
    %v404 = vld [vmem:[%s402 + $0x4] sm:$0xf]
    %v405 = vunpack.c.l.bf16 %v403
    %v406 = vunpack.c.l.bf16 %v404
    %409 = vrot.lane.b32.xlu0 %v405, 1
    %v410 = vpop.permute.xlu0 %409
    %411 = vrot.lane.b32.xlu0 %v406, 1
    %v412 = vpop.permute.xlu0 %411
    %v415 = vmul.f32 %v383, %v410
    %v416 = vmul.f32 %v384, %v412
    %419 = vrot.lane.b32.xlu0 %v415, 2
    %v420 = vpop.permute.xlu0 %419
    %421 = vrot.lane.b32.xlu0 %v416, 2
    %v422 = vpop.permute.xlu0 %421
    %v425 = vadd.f32 %v331, %v420
    %v426 = vadd.f32 %v332, %v422
    %s427 = scalar_lea.vmem %s3, 136
    %v428 = vld [vmem:[%s427] sm:$0xf]
    %v429 = vld [vmem:[%s427 + $0x4] sm:$0xf]
    %v430 = vunpack.c.l.bf16 %v428
    %v431 = vunpack.c.l.bf16 %v429
    %434 = vrot.lane.b32.xlu0 %v430, 2
    %v435 = vpop.permute.xlu0 %434
    %436 = vrot.lane.b32.xlu0 %v431, 2
    %v437 = vpop.permute.xlu0 %436
    %v440 = vmul.f32 %v383, %v435
    %v441 = vmul.f32 %v384, %v437
    %444 = vrot.lane.b32.xlu0 %v440, 126
    %v445 = vpop.permute.xlu0 %444
    %446 = vrot.lane.b32.xlu0 %v441, 126
    %v447 = vpop.permute.xlu0 %446
    %v450 = vadd.f32 %v356, %v445
    %v451 = vadd.f32 %v357, %v447
    %s452 = scalar_lea.vmem %s3, 144
    %v453 = vld [vmem:[%s452] sm:$0xf]
    %v454 = vld [vmem:[%s452 + $0x4] sm:$0xf]
    %v455 = vunpack.c.l.bf16 %v453
    %v456 = vunpack.c.l.bf16 %v454
    %459 = vrot.lane.b32.xlu0 %v455, 3
    %v460 = vpop.permute.xlu0 %459
    %461 = vrot.lane.b32.xlu0 %v456, 3
    %v462 = vpop.permute.xlu0 %461
    %v465 = vmul.f32 %v383, %v460
    %v466 = vmul.f32 %v384, %v462
    %469 = vrot.lane.b32.xlu0 %v465, 126
    %v470 = vpop.permute.xlu0 %469
    %471 = vrot.lane.b32.xlu0 %v466, 126
    %v472 = vpop.permute.xlu0 %471
    %v475 = vadd.f32 %v381, %v470
    %v476 = vadd.f32 %v382, %v472
    %s477 = scalar_lea.vmem %s3, 152
    %v478 = vld [vmem:[%s477] sm:$0xf]
    %v479 = vld [vmem:[%s477 + $0x4] sm:$0xf]
    %v480 = vunpack.c.l.bf16 %v478
    %v481 = vunpack.c.l.bf16 %v479
    %484 = vrot.lane.b32.xlu0 %v480, 4
    %v485 = vpop.permute.xlu0 %484
    %486 = vrot.lane.b32.xlu0 %v481, 4
    %v487 = vpop.permute.xlu0 %486
    %v490 = vmul.f32 %v383, %v485
    %v491 = vmul.f32 %v384, %v487
    %494 = vrot.lane.b32.xlu0 %v490, 126
    %v495 = vpop.permute.xlu0 %494
    %496 = vrot.lane.b32.xlu0 %v491, 126
    %v497 = vpop.permute.xlu0 %496
    %v500 = vadd.f32 %v400, %v495
    %v501 = vadd.f32 %v401, %v497
    %v502 = vld [vmem:[#allocation3 + $0x4] sm:$0xff]
    %v503 = vld [vmem:[#allocation3 + $0xc] sm:$0xff]
    %s504 = scalar_lea.vmem %s3, 160
    %v505 = vld [vmem:[%s504] sm:$0xf]
    %v506 = vld [vmem:[%s504 + $0x4] sm:$0xf]
    %v507 = vunpack.c.l.bf16 %v505
    %v508 = vunpack.c.l.bf16 %v506
    %v509 = vmul.f32 %v502, %v507
    %v510 = vmul.f32 %v503, %v508
    %513 = vrot.lane.b32.xlu0 %v509, 3
    %v514 = vpop.permute.xlu0 %513
    %515 = vrot.lane.b32.xlu0 %v510, 3
    %v516 = vpop.permute.xlu0 %515
    %v519 = vadd.f32 %v425, %v514
    %v520 = vadd.f32 %v426, %v516
    %s521 = scalar_lea.vmem %s3, 168
    %v522 = vld [vmem:[%s521] sm:$0xf]
    %v523 = vld [vmem:[%s521 + $0x4] sm:$0xf]
    %v524 = vunpack.c.l.bf16 %v522
    %v525 = vunpack.c.l.bf16 %v523
    %528 = vrot.lane.b32.xlu0 %v524, 1
    %v529 = vpop.permute.xlu0 %528
    %530 = vrot.lane.b32.xlu0 %v525, 1
    %v531 = vpop.permute.xlu0 %530
    %v534 = vmul.f32 %v502, %v529
    %v535 = vmul.f32 %v503, %v531
    %538 = vrot.lane.b32.xlu0 %v534, 127
    %v539 = vpop.permute.xlu0 %538
    %540 = vrot.lane.b32.xlu0 %v535, 127
    %v541 = vpop.permute.xlu0 %540
    %v544 = vadd.f32 %v450, %v539
    %v545 = vadd.f32 %v451, %v541
    %s546 = scalar_lea.vmem %s3, 176
    %v547 = vld [vmem:[%s546] sm:$0xf]
    %v548 = vld [vmem:[%s546 + $0x4] sm:$0xf]
    %v549 = vunpack.c.l.bf16 %v547
    %v550 = vunpack.c.l.bf16 %v548
    %553 = vrot.lane.b32.xlu0 %v549, 2
    %v554 = vpop.permute.xlu0 %553
    %555 = vrot.lane.b32.xlu0 %v550, 2
    %v556 = vpop.permute.xlu0 %555
    %v559 = vmul.f32 %v502, %v554
    %v560 = vmul.f32 %v503, %v556
    %563 = vrot.lane.b32.xlu0 %v559, 127
    %v564 = vpop.permute.xlu0 %563
    %565 = vrot.lane.b32.xlu0 %v560, 127
    %v566 = vpop.permute.xlu0 %565
    %v569 = vadd.f32 %v475, %v564
    %v570 = vadd.f32 %v476, %v566
    %s571 = scalar_lea.vmem %s3, 184
    %v572 = vld [vmem:[%s571] sm:$0xf]
    %v573 = vld [vmem:[%s571 + $0x4] sm:$0xf]
    %v574 = vunpack.c.l.bf16 %v572
    %v575 = vunpack.c.l.bf16 %v573
    %578 = vrot.lane.b32.xlu0 %v574, 3
    %v579 = vpop.permute.xlu0 %578
    %580 = vrot.lane.b32.xlu0 %v575, 3
    %v581 = vpop.permute.xlu0 %580
    %v584 = vmul.f32 %v502, %v579
    %v585 = vmul.f32 %v503, %v581
    %588 = vrot.lane.b32.xlu0 %v584, 127
    %v589 = vpop.permute.xlu0 %588
    %590 = vrot.lane.b32.xlu0 %v585, 127
    %v591 = vpop.permute.xlu0 %590
    %v594 = vadd.f32 %v500, %v589
    %v595 = vadd.f32 %v501, %v591
    %s596 = scalar_lea.vmem %s3, 192
    %v597 = vld [vmem:[%s596] sm:$0xf]
    %v598 = vld [vmem:[%s596 + $0x4] sm:$0xf]
    %v599 = vunpack.c.l.bf16 %v597
    %v600 = vunpack.c.l.bf16 %v598
    %603 = vrot.lane.b32.xlu0 %v599, 4
    %v604 = vpop.permute.xlu0 %603
    %605 = vrot.lane.b32.xlu0 %v600, 4
    %v606 = vpop.permute.xlu0 %605
    %v609 = vmul.f32 %v502, %v604
    %v610 = vmul.f32 %v503, %v606
    %613 = vrot.lane.b32.xlu0 %v609, 127
    %v614 = vpop.permute.xlu0 %613
    %615 = vrot.lane.b32.xlu0 %v610, 127
    %v616 = vpop.permute.xlu0 %615
    %v619 = vadd.f32 %v519, %v614
    %v620 = vadd.f32 %v520, %v616
    %623 = vrot.lane.b32.xlu0 %v569, 127
    %v624 = vpop.permute.xlu0 %623
    %625 = vrot.lane.b32.xlu0 %v570, 127
    %v626 = vpop.permute.xlu0 %625
    %v629 = vadd.f32 %v544, %v624
    %v630 = vadd.f32 %v545, %v626
    %633 = vrot.lane.b32.xlu0 %v619, 127
    %v634 = vpop.permute.xlu0 %633
    %635 = vrot.lane.b32.xlu0 %v620, 127
    %v636 = vpop.permute.xlu0 %635
    %v639 = vadd.f32 %v594, %v634
    %v640 = vadd.f32 %v595, %v636
    %643 = vrot.lane.b32.xlu0 %v639, 126
    %v644 = vpop.permute.xlu0 %643
    %645 = vrot.lane.b32.xlu0 %v640, 126
    %v646 = vpop.permute.xlu0 %645
    %v649 = vadd.f32 %v629, %v644
    %v650 = vadd.f32 %v630, %v646
    %v651 = vmul.f32 %v649, 0.5
    %v652 = vmul.f32 %v650, 0.5
    %v653 = vtanh.pop %v651
    %v654 = vtanh.pop %v652
    %v655 = vadd.f32 %v653, 1.0
    %v656 = vadd.f32 %v654, 1.0
    %v657 = vmul.f32 %v655, 0.5
    %v658 = vmul.f32 %v656, 0.5
    %v659 = vmul.f32 %v33, 0.95
    %v660 = vmul.f32 %v34, 0.95
    %v661 = vsub.f32 1.0, %v33
    %v662 = vsub.f32 1.0, %v34
    %v663 = vmul.f32 %v661, 0.05
    %v664 = vmul.f32 %v662, 0.05
    %v665 = vmul.f32 %v663, %v657
    %v666 = vmul.f32 %v664, %v658
    %v667 = vadd.f32 %v659, %v665
    %v668 = vadd.f32 %v660, %v666
    %vm669 = vcmask 130048
    %670 = vst.msk [vmem:[#allocation2] sm:$0xff] %vm669, %v667
    %671 = vst.msk [vmem:[#allocation2 + $0x8] sm:$0xff] %vm669, %v668
    // Predicated region
    $region22: #{rule_forward.1} parent=1 // pred_check
      %p672 = pneg %p18
    $region23: #{rule_forward.1} parent=1 // pred_check_branch
      %674 = sbr.rel (%p672) target = $region25
    $region24: #{rule_forward.1} parent=1 // pred_region
      %675 = vst.msk [vmem:[#allocation4] sm:$0xff] %vm669, %v667
      %676 = vst.msk [vmem:[#allocation4 + $0x8] sm:$0xff] %vm669, %v668
      %s677 = scalar_lea.vmem [#allocation4], 16
      %678 = vst.msk [vmem:[%s677] sm:$0xff] %vm669, %v27
      %679 = vst.msk [vmem:[%s677 + $0x8] sm:$0xff] %vm669, %v28
    $region25: #{rule_forward.1} parent=1 // pred_fallthru
      _
    // Predicated region
    $region26: #{rule_forward.1} parent=1 // pred_check
      _
    $region27: #{rule_forward.1} parent=1 // pred_check_branch
      %681 = sbr.rel (0) target = $region29
    $region28: #{rule_forward.1} parent=1 // pred_region
      %s683 = ssub.s32 512, 512
      %684 = vsyncadd [#allocation5], %s683
      %s685 = sshll.u32 [#allocation4], 4
      %s686 = int_to_ptr.vmem [resolvable:$true] %s685
      %691 = dma.vmem_to_hbm [thread:$0]  %s686, 512, %s4, [#allocation5], 128, 128, 8
    $region29: #{rule_forward.1} parent=1 // pred_fallthru
      _
    // Predicated region
    $region30: #{rule_forward.1} parent=1 // pred_check
      _
    $region31: #{rule_forward.1} parent=1 // pred_check_branch
      %693 = sbr.rel (0) target = $region33
    $region32: #{rule_forward.1} parent=1 // pred_region
      %694 = dma.done [#allocation5], 512
    $region33: #{rule_forward.1} parent=1 // pred_fallthru
      _
    %695 = vsyncpa [#allocation5], 1

</llo_original>
